<compile_context>
chip_gen: v5e
topology: v5e:2x2
jax: 0.10.0
libtpu: 0.0.40
codegen_flags: <defaults>
</compile_context>

<pallas_src>
import functools

import jax
import jax.numpy as jnp
import numpy as np
from jax.experimental import pallas as pl
from jax.experimental.pallas import tpu as pltpu


def _round_up(n: int, m: int) -> int:
    return ((n + m - 1) // m) * m


def _choose_batch_tile(batch: int, tile_b: int) -> int:
    """Largest batch tile (multiple of 8 sublanes, <= tile_b) that still yields
    >=2 grid steps whenever batch > 8, so both v7x TensorCores get work."""
    bn8 = _round_up(batch, 8)
    if bn8 <= 8:
        return 8
    two_way = _round_up(pl.cdiv(bn8, 2), 8)
    return max(8, min(tile_b, two_way, bn8))


def _ssm_kernel(x_ref, a_ref, u_ref, b_ref, c_ref, o_ref, *, last_start, state_dim):
    # Hot path: two MXU matmuls (f32 accumulate) + exact-f32 residual/bias add.
    x = x_ref[...]
    ar = jnp.dot(x, a_ref[...], preferred_element_type=jnp.float32)
    exo = jnp.dot(u_ref[...], b_ref[...], preferred_element_type=jnp.float32)
    # Residual x[:, -1, :] == columns [last_start : last_start+state_dim] of the
    # flattened x tile, already resident in VMEM -> no extra DMA, exact f32 add.
    x_last = x[:, last_start:last_start + state_dim].astype(jnp.float32)
    out = ar + exo + x_last + c_ref[...].astype(jnp.float32)
    o_ref[...] = out.astype(o_ref.dtype)


def multi_linear_res_ssm2_forward(x, u, A, B, C, *, tile_b: int = 2048):
    """
    x: (Bn, state_order, state_dim)
    u: (Bn, action_order, action_dim)
    A: (state_order, state_dim, state_dim)
    B: (action_order, action_dim, state_dim)
    C: (1, state_dim)
    returns: (Bn, state_dim)
    """
    Bn, state_order, state_dim = x.shape
    _, action_order, action_dim = u.shape
    Kx = state_order * state_dim
    Ku = action_order * action_dim

    # Row-major flatten of the contraction axes (o, x):
    #   einsum('box,oxy->by', x, A) == x.reshape(Bn, Kx) @ A.reshape(Kx, state_dim)
    x_flat = x.reshape(Bn, Kx)
    a_flat = A.reshape(Kx, state_dim)
    u_flat = u.reshape(Bn, Ku)
    b_flat = B.reshape(Ku, state_dim)

    tb = _choose_batch_tile(Bn, tile_b)
    # Ragged last block (Bn % tb != 0) is handled by Pallas: no jnp.pad, no slice.
    grid = (pl.cdiv(Bn, tb),)

    kernel = functools.partial(
        _ssm_kernel,
        last_start=(state_order - 1) * state_dim,
        state_dim=state_dim,
    )

    act_bytes = jnp.dtype(x.dtype).itemsize
    cost = pl.CostEstimate(
        flops=2 * Bn * (Kx + Ku) * state_dim,
        transcendentals=0,
        bytes_accessed=(Bn * (Kx + Ku + state_dim) * act_bytes
                        + (Kx + Ku + 1) * state_dim * jnp.dtype(A.dtype).itemsize),
    )

    out = pl.pallas_call(
        kernel,
        out_shape=jax.ShapeDtypeStruct((Bn, state_dim), x.dtype),
        grid=grid,
        in_specs=[
            # Batch-tiled activations: new block per grid step.
            pl.BlockSpec((tb, Kx), lambda i: (i, 0)),
            # Weights / bias: constant index_map -> VMEM resident across steps.
            pl.BlockSpec((Kx, state_dim), lambda i: (0, 0)),
            pl.BlockSpec((tb, Ku), lambda i: (i, 0)),
            pl.BlockSpec((Ku, state_dim), lambda i: (0, 0)),
            pl.BlockSpec((1, state_dim), lambda i: (0, 0)),
        ],
        out_specs=pl.BlockSpec((tb, state_dim), lambda i: (i, 0)),
        compiler_params=pltpu.CompilerParams(
            dimension_semantics=("parallel",),
        ),
        cost_estimate=cost,
    )(x_flat, a_flat, u_flat, b_flat, C)

    return out


def _reference_forward(x, u, A, B, C):
    ar = jnp.einsum('box,oxy->by', x, A)
    exo = jnp.einsum('box,oxy->by', u, B)
    return ar + exo + x[:, -1, :] + C


if __name__ == "__main__":
    # Small, module-consistent shapes.
    batch = 8
    state_dim = 32
    action_dim = 16
    state_order = 4
    action_order = 3

    key = jax.random.PRNGKey(0)
    kx, ku, ka, kb, kc = jax.random.split(key, 5)

    # Module __init__ uses zero parameters; use random values so the compute
    # is non-trivial while staying deterministic.
    A = jax.random.normal(ka, (state_order, state_dim, state_dim), jnp.float32) * 0.1
    Bw = jax.random.normal(kb, (action_order, action_dim, state_dim), jnp.float32) * 0.1
    C = jax.random.normal(kc, (1, state_dim), jnp.float32) * 0.1

    x = jax.random.normal(kx, (batch, state_order, state_dim), jnp.float32)
    u = jax.random.normal(ku, (batch, action_order, action_dim), jnp.float32)

    out = jax.block_until_ready(multi_linear_res_ssm2_forward(x, u, A, Bw, C))
    ref = _reference_forward(x, u, A, Bw, C)
    np.testing.assert_allclose(np.asarray(out), np.asarray(ref), rtol=1e-5, atol=1e-5)

    # Non-tile-aligned, multi-tile batch: exercises the ragged last block
    # (no wrapper-side padding) and the >=2-tile grid split (v7x dual-core path).
    big = 1000
    kx2, ku2 = jax.random.split(jax.random.PRNGKey(1), 2)
    x2 = jax.random.normal(kx2, (big, state_order, state_dim), jnp.float32)
    u2 = jax.random.normal(ku2, (big, action_order, action_dim), jnp.float32)
    out2 = jax.block_until_ready(multi_linear_res_ssm2_forward(x2, u2, A, Bw, C))
    ref2 = _reference_forward(x2, u2, A, Bw, C)
    np.testing.assert_allclose(np.asarray(out2), np.asarray(ref2), rtol=1e-5, atol=1e-5)

    print("KERNEL_OK")
</pallas_src>

<mosaic_0001>
module attributes {stable_mosaic.version = 11 : i64} {
  func.func @_ssm_kernel(%arg0: i32, %arg1: memref<8x128xf32, #tpu.memory_space<vmem>>, %arg2: memref<128x32xf32, #tpu.memory_space<vmem>>, %arg3: memref<8x48xf32, #tpu.memory_space<vmem>>, %arg4: memref<48x32xf32, #tpu.memory_space<vmem>>, %arg5: memref<1x32xf32, #tpu.memory_space<vmem>>, %arg6: memref<8x32xf32, #tpu.memory_space<vmem>>) attributes {dimension_semantics = [#tpu.dimension_semantics<parallel>], iteration_bounds = array<i64: 1>, scalar_prefetch = 0 : i64, scratch_operands = 0 : i64, tpu.core_type = #tpu.core_type<tc>, window_params = [{transform_indices = @transform_0, window_bounds = array<i64: 8, 128>}, {pipeline_mode = #tpu.pipeline_mode<synchronous>, transform_indices = @transform_1, window_bounds = array<i64: 128, 32>}, {transform_indices = @transform_2, window_bounds = array<i64: 8, 48>}, {pipeline_mode = #tpu.pipeline_mode<synchronous>, transform_indices = @transform_3, window_bounds = array<i64: 48, 32>}, {pipeline_mode = #tpu.pipeline_mode<synchronous>, transform_indices = @transform_4, window_bounds = array<i64: 1, 32>}, {transform_indices = @transform_5, window_bounds = array<i64: 8, 32>}]} {
    %c0 = arith.constant 0 : index
    %c0_0 = arith.constant 0 : index
    %0 = vector.load %arg1[%c0, %c0_0] : memref<8x128xf32, #tpu.memory_space<vmem>>, vector<8x128xf32>
    %c0_1 = arith.constant 0 : index
    %c0_2 = arith.constant 0 : index
    %1 = vector.load %arg2[%c0_1, %c0_2] : memref<128x32xf32, #tpu.memory_space<vmem>>, vector<128x32xf32>
    %cst = arith.constant dense<0.000000e+00> : vector<8x32xf32>
    %2 = tpu.matmul %0, %1, %cst {dimension_numbers = #tpu.dot_dimension_numbers<[1], [0], [0], [1], [0, 0, 1, 1], [], []>} : vector<8x128xf32>, vector<128x32xf32>, vector<8x32xf32> -> vector<8x32xf32>
    %c0_3 = arith.constant 0 : index
    %c0_4 = arith.constant 0 : index
    %3 = vector.load %arg3[%c0_3, %c0_4] : memref<8x48xf32, #tpu.memory_space<vmem>>, vector<8x48xf32>
    %c0_5 = arith.constant 0 : index
    %c0_6 = arith.constant 0 : index
    %4 = vector.load %arg4[%c0_5, %c0_6] : memref<48x32xf32, #tpu.memory_space<vmem>>, vector<48x32xf32>
    %cst_7 = arith.constant dense<0.000000e+00> : vector<8x32xf32>
    %5 = tpu.matmul %3, %4, %cst_7 {dimension_numbers = #tpu.dot_dimension_numbers<[1], [0], [0], [1], [0, 0, 1, 1], [], []>} : vector<8x48xf32>, vector<48x32xf32>, vector<8x32xf32> -> vector<8x32xf32>
    %6 = vector.extract_strided_slice %0 {offsets = [0, 96], sizes = [8, 32], strides = [1, 1]} : vector<8x128xf32> to vector<8x32xf32>
    %7 = arith.addf %2, %5 : vector<8x32xf32>
    %8 = arith.addf %7, %6 : vector<8x32xf32>
    %c0_8 = arith.constant 0 : index
    %c0_9 = arith.constant 0 : index
    %9 = vector.load %arg5[%c0_8, %c0_9] : memref<1x32xf32, #tpu.memory_space<vmem>>, vector<1x32xf32>
    %10 = vector.broadcast %9 : vector<1x32xf32> to vector<8x32xf32>
    %11 = arith.addf %8, %10 : vector<8x32xf32>
    %c0_10 = arith.constant 0 : index
    %c0_11 = arith.constant 0 : index
    %12 = vector.load %arg6[%c0_10, %c0_11] : memref<8x32xf32, #tpu.memory_space<vmem>>, vector<8x32xf32>
    tpu.vector_store %arg6[%c0_10, %c0_11], %11 {strides = array<i32>} : memref<8x32xf32, #tpu.memory_space<vmem>>, vector<8x32xf32>,
    return
  }
  func.func @transform_0(%arg0: i32) -> (i32, i32) {
    %c0_i32 = arith.constant 0 : i32
    %c0_i32_0 = arith.constant 0 : i32
    return %arg0, %c0_i32 : i32, i32
  }
  func.func @transform_1(%arg0: i32) -> (i32, i32) {
    %c0_i32 = arith.constant 0 : i32
    %c0_i32_0 = arith.constant 0 : i32
    %c0_i32_1 = arith.constant 0 : i32
    return %c0_i32, %c0_i32_0 : i32, i32
  }
  func.func @transform_2(%arg0: i32) -> (i32, i32) {
    %c0_i32 = arith.constant 0 : i32
    %c0_i32_0 = arith.constant 0 : i32
    return %arg0, %c0_i32 : i32, i32
  }
  func.func @transform_3(%arg0: i32) -> (i32, i32) {
    %c0_i32 = arith.constant 0 : i32
    %c0_i32_0 = arith.constant 0 : i32
    %c0_i32_1 = arith.constant 0 : i32
    return %c0_i32, %c0_i32_0 : i32, i32
  }
  func.func @transform_4(%arg0: i32) -> (i32, i32) {
    %c0_i32 = arith.constant 0 : i32
    %c0_i32_0 = arith.constant 0 : i32
    %c0_i32_1 = arith.constant 0 : i32
    return %c0_i32, %c0_i32_0 : i32, i32
  }
  func.func @transform_5(%arg0: i32) -> (i32, i32) {
    %c0_i32 = arith.constant 0 : i32
    %c0_i32_0 = arith.constant 0 : i32
    return %arg0, %c0_i32 : i32, i32
  }
}

</mosaic_0001>

<llo_original>
// kernel: tpu_custom_call.1
$region0: #{tpu_custom_call.1}
  #allocation0 [shape = 'u32[]', space=smem, size = 0x4, offset = 0x4, fixed_abs, tag = 'smem constant byte address 0x4 - core index']
  #allocation1 [shape = 'u32[72,128]{1,0:T(1,128)}', space=vmem, size = 0x9000, scoped, tag = 'internal scratch']
  %s0 = inlined_call_operand.vmem [shape: f32[8,128], index: 0, kind: input, shape index: {}]
  %s1 = inlined_call_operand.vmem [shape: f32[128,32], index: 1, kind: input, shape index: {}]
  %s2 = inlined_call_operand.vmem [shape: f32[8,48], index: 2, kind: input, shape index: {}]
  %s3 = inlined_call_operand.vmem [shape: f32[48,32], index: 3, kind: input, shape index: {}]
  %s4 = inlined_call_operand.vmem [shape: f32[1,32], index: 4, kind: input, shape index: {}]
  %s5 = inlined_call_operand.hbm [shape: f32[8,32], index: 5, kind: output, shape index: {}]
  %s6 = sld [smem:[#allocation0]]
  $region30: #{tpu_custom_call.1} parent=0
    _
  %s8 = ssub.s32 1, %s6
  %s9 = scalar_select 0, %s8, %s6
  $region1: #{tpu_custom_call.1} parent=0
    #allocation2 [shape = 'u8[4096]{0}', space=vmem, size = 0x1000, scoped, tag = 'output window, operand 0, single buffered']
    #allocation3 [shape = 's32[1]{0}', space=sflag, size = 0x4, scoped, tag = 'scoped memory for tpu_custom_call.1']
    %10 = vsyncpa [#allocation3], 0
    // Predicated region
    $region2: #{tpu_custom_call.1} parent=1 // pred_check
      _
    $region3: #{tpu_custom_call.1} parent=1 // pred_check_branch
      %12 = sbr.rel (0) target = $region5
    $region4: #{tpu_custom_call.1} parent=1 // pred_region
      _
    $region5: #{tpu_custom_call.1} parent=1 // pred_fallthru
      _
    // Predicated region
    $region6: #{tpu_custom_call.1} parent=1 // pred_check
      _
    $region7: #{tpu_custom_call.1} parent=1 // pred_check_branch
      %14 = sbr.rel (0) target = $region9
    $region8: #{tpu_custom_call.1} parent=1 // pred_region
      _
    $region9: #{tpu_custom_call.1} parent=1 // pred_fallthru
      _
    // Predicated region
    $region10: #{tpu_custom_call.1} parent=1 // pred_check
      _
    $region11: #{tpu_custom_call.1} parent=1 // pred_check_branch
      %16 = sbr.rel (0) target = $region13
    $region12: #{tpu_custom_call.1} parent=1 // pred_region
      _
    $region13: #{tpu_custom_call.1} parent=1 // pred_fallthru
      _
    // Predicated region
    $region14: #{tpu_custom_call.1} parent=1 // pred_check
      _
    $region15: #{tpu_custom_call.1} parent=1 // pred_check_branch
      %18 = sbr.rel (0) target = $region17
    $region16: #{tpu_custom_call.1} parent=1 // pred_region
      _
    $region17: #{tpu_custom_call.1} parent=1 // pred_fallthru
      _
    // Predicated region
    $region18: #{tpu_custom_call.1} parent=1 // pred_check
      _
    $region19: #{tpu_custom_call.1} parent=1 // pred_check_branch
      %20 = sbr.rel (0) target = $region21
    $region20: #{tpu_custom_call.1} parent=1 // pred_region
      _
    $region21: #{tpu_custom_call.1} parent=1 // pred_fallthru
      _
    %v21 = vld [vmem:[%s0] sm:$0xff]
    %v22 = vld [vmem:[%s1] sm:$0xff]
    %v23 = vld [vmem:[%s1 + $0x8] sm:$0xff]
    %v24 = vld [vmem:[%s1 + $0x10] sm:$0xff]
    %v25 = vld [vmem:[%s1 + $0x18] sm:$0xff]
    %v26 = vld [vmem:[%s1 + $0x20] sm:$0xff]
    %v27 = vld [vmem:[%s1 + $0x28] sm:$0xff]
    %v28 = vld [vmem:[%s1 + $0x30] sm:$0xff]
    %v29 = vld [vmem:[%s1 + $0x38] sm:$0xff]
    %v30 = vld [vmem:[%s1 + $0x40] sm:$0xff]
    %v31 = vld [vmem:[%s1 + $0x48] sm:$0xff]
    %v32 = vld [vmem:[%s1 + $0x50] sm:$0xff]
    %v33 = vld [vmem:[%s1 + $0x58] sm:$0xff]
    %v34 = vld [vmem:[%s1 + $0x60] sm:$0xff]
    %v35 = vld [vmem:[%s1 + $0x68] sm:$0xff]
    %v36 = vld [vmem:[%s1 + $0x70] sm:$0xff]
    %v37 = vld [vmem:[%s1 + $0x78] sm:$0xff]
    %v38 = vld [vmem:[%s2] sm:$0xff]
    %v39 = vld [vmem:[%s3] sm:$0xff]
    %v40 = vld [vmem:[%s3 + $0x8] sm:$0xff]
    %v41 = vld [vmem:[%s3 + $0x10] sm:$0xff]
    %v42 = vld [vmem:[%s3 + $0x18] sm:$0xff]
    %v43 = vld [vmem:[%s3 + $0x20] sm:$0xff]
    %v44 = vld [vmem:[%s3 + $0x28] sm:$0xff]
    %vm45 = vcmask 392192
    %v47 = vsel %vm45, %v38, 0
    %49 = vmatpush.msra.mxu0 0.0
    %50 = vmatpush.msra.mxu0 0.0
    %51 = vmatpush.msra.mxu0 0.0
    %52 = vmatpush.msra.mxu0 0.0
    %53 = vmatpush.msra.mxu0 0.0
    %54 = vmatpush.msra.mxu0 0.0
    %55 = vmatpush.msra.mxu0 0.0
    %56 = vmatpush.msra.mxu0 0.0
    %57 = vmatpush.msra.mxu0 0.0
    %58 = vmatpush.msra.mxu0 0.0
    %59 = vmatpush.msra.mxu0 %v44
    %60 = vmatpush.msra.mxu0 %v43
    %61 = vmatpush.msra.mxu0 %v42
    %62 = vmatpush.msra.mxu0 %v41
    %63 = vmatpush.msra.mxu0 %v40
    %64 = vmatpush.msra.mxu0 %v39
    %65 = vmatmul.f32.gmra.mxu0 %v47
    %v66 = vpop.f32.mrf.mxu0
    %v67 = vadd.f32 0.0, %v66
    %68 = vdwg.mxu0
    %69 = vmatpush.msra.mxu0 %v37
    %70 = vmatpush.msra.mxu0 %v36
    %71 = vmatpush.msra.mxu0 %v35
    %72 = vmatpush.msra.mxu0 %v34
    %73 = vmatpush.msra.mxu0 %v33
    %74 = vmatpush.msra.mxu0 %v32
    %75 = vmatpush.msra.mxu0 %v31
    %76 = vmatpush.msra.mxu0 %v30
    %77 = vmatpush.msra.mxu0 %v29
    %78 = vmatpush.msra.mxu0 %v28
    %79 = vmatpush.msra.mxu0 %v27
    %80 = vmatpush.msra.mxu0 %v26
    %81 = vmatpush.msra.mxu0 %v25
    %82 = vmatpush.msra.mxu0 %v24
    %83 = vmatpush.msra.mxu0 %v23
    %84 = vmatpush.msra.mxu0 %v22
    %85 = vmatmul.f32.gmra.mxu0 %v21
    %v86 = vpop.f32.mrf.mxu0
    %v87 = vadd.f32 %v67, %v86
    %88 = vdwg.mxu0
    %90 = vrot.lane.b32.xlu0 %v21, 32
    %v91 = vpop.permute.xlu0 %90
    %v93 = vadd.f32 %v87, %v91
    %v94 = vld [vmem:[%s4] sm:$0x1]
    %v96 = vperm.slane %v94, 0
    %v98 = vadd.f32 %v93, %v96
    %vm99 = vcmask 261120
    %100 = vst.msk [vmem:[#allocation2] sm:$0xff] %vm99, %v98
    // Predicated region
    $region22: #{tpu_custom_call.1} parent=1 // pred_check
      _
    $region23: #{tpu_custom_call.1} parent=1 // pred_check_branch
      %102 = sbr.rel (0) target = $region25
    $region24: #{tpu_custom_call.1} parent=1 // pred_region
      %104 = vsyncadd [#allocation3], 0
      %s106 = sshll.u32 [#allocation2], 4
      %s107 = int_to_ptr.vmem [resolvable:$true] %s106
      %s108 = sshll.u32 %s5, 4
      %s109 = int_to_ptr.hbm [resolvable:$true] %s108
      %111 = dma.vmem_to_hbm [thread:$0]  %s107, 128, %s109, [#allocation3]
    $region25: #{tpu_custom_call.1} parent=1 // pred_fallthru
      _
    // Predicated region
    $region26: #{tpu_custom_call.1} parent=1 // pred_check
      _
    $region27: #{tpu_custom_call.1} parent=1 // pred_check_branch
      %113 = sbr.rel (0) target = $region29
    $region28: #{tpu_custom_call.1} parent=1 // pred_region
      %115 = dma.done [#allocation3], 128
    $region29: #{tpu_custom_call.1} parent=1 // pred_fallthru
      _
    %116 = vsyncpa [#allocation3], 1

</llo_original>
